<compile_context>
chip_gen: v5e
topology: v5e:2x2
jax: 0.10.0
libtpu: 0.0.40
codegen_flags: <defaults>
</compile_context>

<pallas_src>
import math

import jax
import jax.numpy as jnp
from jax.experimental import pallas as pl
from jax.experimental.pallas import tpu as pltpu


def _round_up(x, m):
    return ((x + m - 1) // m) * m


def critic_kernel(s_ref, a_ref, w1s_ref, w1a_ref, b1_ref,
                  w2_ref, b2_ref, w3_ref, b3_ref, o_ref):
    # fc1 on the MXU, split across the (s, a) inputs (no concat needed).
    h1 = jnp.dot(s_ref[...], w1s_ref[...], preferred_element_type=jnp.float32)
    h1 = h1 + jnp.dot(a_ref[...], w1a_ref[...], preferred_element_type=jnp.float32)
    h1 = jnp.maximum(h1 + b1_ref[...], 0.0)          # bias + ReLU (VPU)

    # Single cast to bf16: native MXU operand dtype for fc2.
    h1 = h1.astype(w2_ref.dtype)

    # fc2 on the MXU.
    h2 = jnp.dot(h1, w2_ref[...], preferred_element_type=jnp.float32)
    h2 = jnp.maximum(h2 + b2_ref[...], 0.0)          # bias + ReLU (VPU)

    # fc3 (128 -> 1): VPU multiply + XLU lane reduction instead of an N=1 matmul.
    q = jnp.sum(h2 * w3_ref[...], axis=-1, keepdims=True)          # (tb, 1) f32

    # Lane-dense store: one small XLU transpose, then a full-width (1, tb) row.
    o_ref[...] = (q.T + b3_ref[...]).reshape(o_ref.shape).astype(o_ref.dtype)


def critic_forward(s, a, params, *, batch_tile=2048):
    """s: (B, n_state), a: (B, n_action) -> (B, 1) float32 Q-values."""
    w1s, w1a, b1, w2, b2, w3, b3 = params
    B, n_state = s.shape
    n_action = a.shape[1]
    weights = (w1s, w1a, b1, w2, b2, w3, b3)

    # Batch tile: large (per-grid-step overhead dominates small tiles), rounded
    # to the sublane quantum (8).  If the whole batch would be a single step,
    # split into >=2 "parallel" steps so v7x's 2 TensorCores share the work.
    tb = min(batch_tile, _round_up(B, 8))
    if B > 16 and pl.cdiv(B, tb) < 2:
        tb = _round_up(pl.cdiv(B, 2), 8)
    nt = pl.cdiv(B, tb)

    # Weights stay VMEM-resident: constant index_map, full-array blocks.
    wspec = lambda arr: pl.BlockSpec(arr.shape, lambda i: (0,) * arr.ndim)

    out = pl.pallas_call(
        critic_kernel,
        # Lane-dense output: one (1, tb) row per tile, reshaped to (B, 1) below.
        out_shape=jax.ShapeDtypeStruct((nt, 1, tb), jnp.float32),
        grid=(nt,),
        in_specs=[pl.BlockSpec((tb, n_state), lambda i: (i, 0)),
                  pl.BlockSpec((tb, n_action), lambda i: (i, 0))]
                 + [wspec(w) for w in weights],
        out_specs=pl.BlockSpec((1, 1, tb), lambda i: (i, 0, 0)),
        compiler_params=pltpu.CompilerParams(
            dimension_semantics=("parallel",),        # shard batch over TCs
            vmem_limit_bytes=48 * 1024 * 1024),       # big tiles; < v7x 64 MiB
    )(s, a, *weights)

    # (nt, 1, tb) -> (B, 1): metadata reshape + cheap slice (drops OOB rows of
    # the partial last tile). Rows are independent, so padded rows are safe.
    return out.reshape(-1)[:B].reshape(B, 1)


def init_critic_params(key, n_state, n_action, init_w=0.003, dtype=jnp.bfloat16):
    """PyTorch-Linear-style init (uniform +/- 1/sqrt(fan_in)); fc3 uses +/- init_w.

    Weights stored (in, out) — transposed vs torch's (out, in); fc1 split into
    (w1_s, w1_a); fc3 weight stored as a (1, 128) row.  bf16 by default to
    halve HBM traffic (matmuls still accumulate in f32).
    """
    k = jax.random.split(key, 6)
    d_in = n_state + n_action

    def unif(kk, shape, bound):
        return jax.random.uniform(kk, shape, jnp.float32, -bound, bound).astype(dtype)

    bnd1 = 1.0 / math.sqrt(d_in)
    bnd2 = 1.0 / math.sqrt(128.0)
    w1 = unif(k[0], (d_in, 128), bnd1)
    w1s, w1a = w1[:n_state, :], w1[n_state:, :]
    b1 = unif(k[1], (1, 128), bnd1)
    w2 = unif(k[2], (128, 128), bnd2)
    b2 = unif(k[3], (1, 128), bnd2)
    w3 = unif(k[4], (1, 128), init_w)   # fc3 weight as a lane row
    b3 = unif(k[5], (1, 1), init_w)
    return (w1s, w1a, b1, w2, b2, w3, b3)


def critic_ref(s, a, params):
    """Pure-JAX f32 reference (params/inputs upcast from their stored dtype)."""
    w1s, w1a, b1, w2, b2, w3, b3 = [p.astype(jnp.float32) for p in params]
    s32, a32 = s.astype(jnp.float32), a.astype(jnp.float32)
    h1 = jnp.maximum(s32 @ w1s + a32 @ w1a + b1, 0.0)
    h2 = jnp.maximum(h1 @ w2 + b2, 0.0)
    return h2 @ w3.T + b3


if __name__ == "__main__":
    n_state, n_action = 16, 8
    key = jax.random.PRNGKey(0)
    kp, k1, k2, k3, k4 = jax.random.split(key, 5)
    params = init_critic_params(kp, n_state, n_action)          # bf16 weights

    # Small-batch run (single grid step).
    B = 8
    s = jax.random.normal(k1, (B, n_state), jnp.float32).astype(jnp.bfloat16)
    a = jax.random.normal(k2, (B, n_action), jnp.float32).astype(jnp.bfloat16)
    q = critic_forward(s, a, params)
    jax.block_until_ready(q)
    assert q.shape == (B, 1) and q.dtype == jnp.float32
    ref = critic_ref(s, a, params)
    assert jnp.allclose(q, ref, atol=5e-3, rtol=2e-2), \
        float(jnp.max(jnp.abs(q - ref)))

    # Batch-tiled path: ragged batch (partial last tile) + >=2 parallel steps.
    Bb = 1000
    sb = jax.random.normal(k3, (Bb, n_state), jnp.float32).astype(jnp.bfloat16)
    ab = jax.random.normal(k4, (Bb, n_action), jnp.float32).astype(jnp.bfloat16)
    qb = critic_forward(sb, ab, params, batch_tile=2048)
    jax.block_until_ready(qb)
    assert qb.shape == (Bb, 1)
    refb = critic_ref(sb, ab, params)
    assert jnp.allclose(qb, refb, atol=5e-3, rtol=2e-2), \
        float(jnp.max(jnp.abs(qb - refb)))

    print("KERNEL_OK")
</pallas_src>

<mosaic_0001>
module attributes {stable_mosaic.version = 11 : i64} {
  func.func @critic_kernel(%arg0: i32, %arg1: memref<8x16xbf16, #tpu.memory_space<vmem>>, %arg2: memref<8x8xbf16, #tpu.memory_space<vmem>>, %arg3: memref<16x128xbf16, #tpu.memory_space<vmem>>, %arg4: memref<8x128xbf16, #tpu.memory_space<vmem>>, %arg5: memref<1x128xbf16, #tpu.memory_space<vmem>>, %arg6: memref<128x128xbf16, #tpu.memory_space<vmem>>, %arg7: memref<1x128xbf16, #tpu.memory_space<vmem>>, %arg8: memref<1x128xbf16, #tpu.memory_space<vmem>>, %arg9: memref<1x1xbf16, #tpu.memory_space<vmem>>, %arg10: memref<1x1x8xf32, #tpu.memory_space<vmem>>) attributes {dimension_semantics = [#tpu.dimension_semantics<parallel>], iteration_bounds = array<i64: 1>, scalar_prefetch = 0 : i64, scratch_operands = 0 : i64, tpu.core_type = #tpu.core_type<tc>, window_params = [{transform_indices = @transform_0, window_bounds = array<i64: 8, 16>}, {transform_indices = @transform_1, window_bounds = array<i64: 8, 8>}, {pipeline_mode = #tpu.pipeline_mode<synchronous>, transform_indices = @transform_2, window_bounds = array<i64: 16, 128>}, {pipeline_mode = #tpu.pipeline_mode<synchronous>, transform_indices = @transform_3, window_bounds = array<i64: 8, 128>}, {pipeline_mode = #tpu.pipeline_mode<synchronous>, transform_indices = @transform_4, window_bounds = array<i64: 1, 128>}, {pipeline_mode = #tpu.pipeline_mode<synchronous>, transform_indices = @transform_5, window_bounds = array<i64: 128, 128>}, {pipeline_mode = #tpu.pipeline_mode<synchronous>, transform_indices = @transform_6, window_bounds = array<i64: 1, 128>}, {pipeline_mode = #tpu.pipeline_mode<synchronous>, transform_indices = @transform_7, window_bounds = array<i64: 1, 128>}, {pipeline_mode = #tpu.pipeline_mode<synchronous>, transform_indices = @transform_8, window_bounds = array<i64: 1, 1>}, {transform_indices = @transform_9, window_bounds = array<i64: 1, 1, 8>}]} {
    %c0 = arith.constant 0 : index
    %c0_0 = arith.constant 0 : index
    %0 = vector.load %arg1[%c0, %c0_0] : memref<8x16xbf16, #tpu.memory_space<vmem>>, vector<8x16xbf16>
    %c0_1 = arith.constant 0 : index
    %c0_2 = arith.constant 0 : index
    %1 = vector.load %arg3[%c0_1, %c0_2] : memref<16x128xbf16, #tpu.memory_space<vmem>>, vector<16x128xbf16>
    %cst = arith.constant dense<0.000000e+00> : vector<8x128xf32>
    %2 = tpu.matmul %0, %1, %cst {dimension_numbers = #tpu.dot_dimension_numbers<[1], [0], [0], [1], [0, 0, 1, 1], [], []>} : vector<8x16xbf16>, vector<16x128xbf16>, vector<8x128xf32> -> vector<8x128xf32>
    %c0_3 = arith.constant 0 : index
    %c0_4 = arith.constant 0 : index
    %3 = vector.load %arg2[%c0_3, %c0_4] : memref<8x8xbf16, #tpu.memory_space<vmem>>, vector<8x8xbf16>
    %c0_5 = arith.constant 0 : index
    %c0_6 = arith.constant 0 : index
    %4 = vector.load %arg4[%c0_5, %c0_6] : memref<8x128xbf16, #tpu.memory_space<vmem>>, vector<8x128xbf16>
    %cst_7 = arith.constant dense<0.000000e+00> : vector<8x128xf32>
    %5 = tpu.matmul %3, %4, %cst_7 {dimension_numbers = #tpu.dot_dimension_numbers<[1], [0], [0], [1], [0, 0, 1, 1], [], []>} : vector<8x8xbf16>, vector<8x128xbf16>, vector<8x128xf32> -> vector<8x128xf32>
    %6 = arith.addf %2, %5 : vector<8x128xf32>
    %c0_8 = arith.constant 0 : index
    %c0_9 = arith.constant 0 : index
    %7 = vector.load %arg5[%c0_8, %c0_9] : memref<1x128xbf16, #tpu.memory_space<vmem>>, vector<1x128xbf16>
    %8 = arith.extf %7 : vector<1x128xbf16> to vector<1x128xf32>
    %9 = vector.broadcast %8 : vector<1x128xf32> to vector<8x128xf32>
    %10 = arith.addf %6, %9 : vector<8x128xf32>
    %cst_10 = arith.constant 0.000000e+00 : f32
    %11 = vector.broadcast %cst_10 : f32 to vector<8x128xf32>
    %12 = arith.maximumf %10, %11 : vector<8x128xf32>
    %13 = arith.truncf %12 : vector<8x128xf32> to vector<8x128xbf16>
    %c0_11 = arith.constant 0 : index
    %c0_12 = arith.constant 0 : index
    %14 = vector.load %arg6[%c0_11, %c0_12] : memref<128x128xbf16, #tpu.memory_space<vmem>>, vector<128x128xbf16>
    %cst_13 = arith.constant dense<0.000000e+00> : vector<8x128xf32>
    %15 = tpu.matmul %13, %14, %cst_13 {dimension_numbers = #tpu.dot_dimension_numbers<[1], [0], [0], [1], [0, 0, 1, 1], [], []>} : vector<8x128xbf16>, vector<128x128xbf16>, vector<8x128xf32> -> vector<8x128xf32>
    %c0_14 = arith.constant 0 : index
    %c0_15 = arith.constant 0 : index
    %16 = vector.load %arg7[%c0_14, %c0_15] : memref<1x128xbf16, #tpu.memory_space<vmem>>, vector<1x128xbf16>
    %17 = arith.extf %16 : vector<1x128xbf16> to vector<1x128xf32>
    %18 = vector.broadcast %17 : vector<1x128xf32> to vector<8x128xf32>
    %19 = arith.addf %15, %18 : vector<8x128xf32>
    %cst_16 = arith.constant 0.000000e+00 : f32
    %20 = vector.broadcast %cst_16 : f32 to vector<8x128xf32>
    %21 = arith.maximumf %19, %20 : vector<8x128xf32>
    %c0_17 = arith.constant 0 : index
    %c0_18 = arith.constant 0 : index
    %22 = vector.load %arg8[%c0_17, %c0_18] : memref<1x128xbf16, #tpu.memory_space<vmem>>, vector<1x128xbf16>
    %23 = arith.extf %22 : vector<1x128xbf16> to vector<1x128xf32>
    %24 = vector.broadcast %23 : vector<1x128xf32> to vector<8x128xf32>
    %25 = arith.mulf %21, %24 : vector<8x128xf32>
    %cst_19 = arith.constant dense<0.000000e+00> : vector<8xf32>
    %26 = vector.multi_reduction <add>, %25, %cst_19 [1] : vector<8x128xf32> to vector<8xf32>
    %27 = vector.shape_cast %26 : vector<8xf32> to vector<8x1xf32>
    %28 = tpu.transpose %27, [1, 0] : vector<8x1xf32> -> vector<1x8xf32>
    %c0_20 = arith.constant 0 : index
    %c0_21 = arith.constant 0 : index
    %29 = vector.load %arg9[%c0_20, %c0_21] : memref<1x1xbf16, #tpu.memory_space<vmem>>, vector<1x1xbf16>
    %30 = arith.extf %29 : vector<1x1xbf16> to vector<1x1xf32>
    %31 = vector.broadcast %30 : vector<1x1xf32> to vector<1x8xf32>
    %32 = arith.addf %28, %31 : vector<1x8xf32>
    %33 = vector.shape_cast %32 : vector<1x8xf32> to vector<1x1x8xf32>
    %c0_22 = arith.constant 0 : index
    %c0_23 = arith.constant 0 : index
    %c0_24 = arith.constant 0 : index
    %34 = vector.load %arg10[%c0_22, %c0_23, %c0_24] : memref<1x1x8xf32, #tpu.memory_space<vmem>>, vector<1x1x8xf32>
    tpu.vector_store %arg10[%c0_22, %c0_23, %c0_24], %33 {strides = array<i32>} : memref<1x1x8xf32, #tpu.memory_space<vmem>>, vector<1x1x8xf32>,
    return
  }
  func.func @transform_0(%arg0: i32) -> (i32, i32) {
    %c0_i32 = arith.constant 0 : i32
    %c0_i32_0 = arith.constant 0 : i32
    return %arg0, %c0_i32 : i32, i32
  }
  func.func @transform_1(%arg0: i32) -> (i32, i32) {
    %c0_i32 = arith.constant 0 : i32
    %c0_i32_0 = arith.constant 0 : i32
    return %arg0, %c0_i32 : i32, i32
  }
  func.func @transform_2(%arg0: i32) -> (i32, i32) {
    %c0_i32 = arith.constant 0 : i32
    %c0_i32_0 = arith.constant 0 : i32
    %c0_i32_1 = arith.constant 0 : i32
    return %c0_i32, %c0_i32_0 : i32, i32
  }
  func.func @transform_3(%arg0: i32) -> (i32, i32) {
    %c0_i32 = arith.constant 0 : i32
    %c0_i32_0 = arith.constant 0 : i32
    %c0_i32_1 = arith.constant 0 : i32
    return %c0_i32, %c0_i32_0 : i32, i32
  }
  func.func @transform_4(%arg0: i32) -> (i32, i32) {
    %c0_i32 = arith.constant 0 : i32
    %c0_i32_0 = arith.constant 0 : i32
    %c0_i32_1 = arith.constant 0 : i32
    return %c0_i32, %c0_i32_0 : i32, i32
  }
  func.func @transform_5(%arg0: i32) -> (i32, i32) {
    %c0_i32 = arith.constant 0 : i32
    %c0_i32_0 = arith.constant 0 : i32
    %c0_i32_1 = arith.constant 0 : i32
    return %c0_i32, %c0_i32_0 : i32, i32
  }
  func.func @transform_6(%arg0: i32) -> (i32, i32) {
    %c0_i32 = arith.constant 0 : i32
    %c0_i32_0 = arith.constant 0 : i32
    %c0_i32_1 = arith.constant 0 : i32
    return %c0_i32, %c0_i32_0 : i32, i32
  }
  func.func @transform_7(%arg0: i32) -> (i32, i32) {
    %c0_i32 = arith.constant 0 : i32
    %c0_i32_0 = arith.constant 0 : i32
    %c0_i32_1 = arith.constant 0 : i32
    return %c0_i32, %c0_i32_0 : i32, i32
  }
  func.func @transform_8(%arg0: i32) -> (i32, i32) {
    %c0_i32 = arith.constant 0 : i32
    %c0_i32_0 = arith.constant 0 : i32
    %c0_i32_1 = arith.constant 0 : i32
    return %c0_i32, %c0_i32_0 : i32, i32
  }
  func.func @transform_9(%arg0: i32) -> (i32, i32, i32) {
    %c0_i32 = arith.constant 0 : i32
    %c0_i32_0 = arith.constant 0 : i32
    %c0_i32_1 = arith.constant 0 : i32
    return %arg0, %c0_i32, %c0_i32_0 : i32, i32, i32
  }
}

</mosaic_0001>

<llo_original>
// kernel: tpu_custom_call.1
$region0: #{tpu_custom_call.1}
  #allocation0 [shape = 'u32[]', space=smem, size = 0x4, offset = 0x4, fixed_abs, tag = 'smem constant byte address 0x4 - core index']
  #allocation1 [shape = 'u32[72,128]{1,0:T(1,128)}', space=vmem, size = 0x9000, scoped, tag = 'internal scratch']
  #allocation2 [shape = 'bf16[1,1]{1,0:T(2,128)S(1)}', space=vmem, size = 0x200, scoped, tag = 'scoped memory for tpu_custom_call.1']
  %s0 = inlined_call_operand.hbm [shape: bf16[8,16], index: 0, kind: input, shape index: {}]
  %s1 = inlined_call_operand.hbm [shape: bf16[8,8], index: 1, kind: input, shape index: {}]
  %s2 = inlined_call_operand.hbm [shape: bf16[16,128], index: 2, kind: input, shape index: {}]
  %s3 = inlined_call_operand.vmem [shape: bf16[8,128], index: 3, kind: input, shape index: {}]
  %s4 = inlined_call_operand.vmem [shape: bf16[1,128], index: 4, kind: input, shape index: {}]
  %s5 = inlined_call_operand.hbm [shape: bf16[128,128], index: 5, kind: input, shape index: {}]
  %s6 = inlined_call_operand.vmem [shape: bf16[1,128], index: 6, kind: input, shape index: {}]
  %s7 = inlined_call_operand.vmem [shape: bf16[1,128], index: 7, kind: input, shape index: {}]
  %s8 = inlined_call_operand.<no memory space> [shape: bf16[1,1], index: 8, kind: input, shape index: {}]
  %s9 = inlined_call_operand.hbm [shape: f32[1,1,8], index: 9, kind: output, shape index: {}]
  %s10 = sld [smem:[#allocation0]]
  $region62: #{tpu_custom_call.1} parent=0
    _
  %s12 = ssub.s32 1, %s10
  %s13 = scalar_select 0, %s12, %s10
  %v14 = vstv %s8
  %15 = vst [vmem:[#allocation2] sm:$0x1] %v14
  $region1: #{tpu_custom_call.1} parent=0
    #allocation3 [shape = 'u8[2048]{0}', space=vmem, size = 0x800, scoped, tag = 'input window, operand 0, single buffered']
    #allocation4 [shape = 's32[1]{0}', space=sflag, size = 0x4, scoped, tag = 'scoped memory for tpu_custom_call.1']
    #allocation5 [shape = 's32[1]{0}', space=sflag, size = 0x4, scoped, tag = 'scoped memory for tpu_custom_call.1']
    #allocation6 [shape = 'u8[2048]{0}', space=vmem, size = 0x800, scoped, tag = 'input window, operand 1, single buffered']
    #allocation7 [shape = 's32[1]{0}', space=sflag, size = 0x4, scoped, tag = 'scoped memory for tpu_custom_call.1']
    #allocation8 [shape = 'u8[4096]{0}', space=vmem, size = 0x1000, scoped, tag = 'input window, operand 2, single buffered']
    #allocation9 [shape = 'u8[32768]{0}', space=vmem, size = 0x8000, scoped, tag = 'input window, operand 5, single buffered']
    #allocation10 [shape = 's32[1]{0}', space=sflag, size = 0x4, scoped, tag = 'scoped memory for tpu_custom_call.1']
    #allocation11 [shape = 'u8[512]{0}', space=vmem, size = 0x400, scoped, tag = 'output window, operand 0, single buffered']
    %16 = vsyncpa [#allocation4], 0
    %17 = vsyncpa [#allocation7], 0
    %18 = vsyncpa [#allocation10], 0
    %19 = vsyncpa [#allocation5], 0
    // Predicated region
    $region2: #{tpu_custom_call.1} parent=1 // pred_check
      _
    $region3: #{tpu_custom_call.1} parent=1 // pred_check_branch
      %21 = sbr.rel (0) target = $region5
    $region4: #{tpu_custom_call.1} parent=1 // pred_region
      %23 = vsyncadd [#allocation4], 0
      %s25 = sshll.u32 %s0, 4
      %s26 = int_to_ptr.hbm [resolvable:$true] %s25
      %s27 = sshll.u32 [#allocation3], 4
      %s28 = int_to_ptr.vmem [resolvable:$true] %s27
      %30 = dma.hbm_to_vmem [thread:$0]  %s26, 64, %s28, [#allocation4]
    $region5: #{tpu_custom_call.1} parent=1 // pred_fallthru
      _
    // Predicated region
    $region6: #{tpu_custom_call.1} parent=1 // pred_check
      _
    $region7: #{tpu_custom_call.1} parent=1 // pred_check_branch
      %32 = sbr.rel (0) target = $region9
    $region8: #{tpu_custom_call.1} parent=1 // pred_region
      %34 = vsyncadd [#allocation7], 0
      %s36 = sshll.u32 %s1, 4
      %s37 = int_to_ptr.hbm [resolvable:$true] %s36
      %s38 = sshll.u32 [#allocation6], 4
      %s39 = int_to_ptr.vmem [resolvable:$true] %s38
      %41 = dma.hbm_to_vmem [thread:$0]  %s37, 64, %s39, [#allocation7]
    $region9: #{tpu_custom_call.1} parent=1 // pred_fallthru
      _
    // Predicated region
    $region10: #{tpu_custom_call.1} parent=1 // pred_check
      _
    $region11: #{tpu_custom_call.1} parent=1 // pred_check_branch
      %43 = sbr.rel (0) target = $region13
    $region12: #{tpu_custom_call.1} parent=1 // pred_region
      %45 = vsyncadd [#allocation7], 0
      %s46 = sshll.u32 %s2, 4
      %s47 = int_to_ptr.hbm [resolvable:$true] %s46
      %s48 = sshll.u32 [#allocation8], 4
      %s49 = int_to_ptr.vmem [resolvable:$true] %s48
      %54 = dma.hbm_to_vmem [thread:$0]  %s47, 128, %s49, [#allocation7], 64, 64, 4
    $region13: #{tpu_custom_call.1} parent=1 // pred_fallthru
      _
    // Predicated region
    $region14: #{tpu_custom_call.1} parent=1 // pred_check
      _
    $region15: #{tpu_custom_call.1} parent=1 // pred_check_branch
      %56 = sbr.rel (0) target = $region17
    $region16: #{tpu_custom_call.1} parent=1 // pred_region
      _
    $region17: #{tpu_custom_call.1} parent=1 // pred_fallthru
      _
    // Predicated region
    $region18: #{tpu_custom_call.1} parent=1 // pred_check
      _
    $region19: #{tpu_custom_call.1} parent=1 // pred_check_branch
      %58 = sbr.rel (0) target = $region21
    $region20: #{tpu_custom_call.1} parent=1 // pred_region
      _
    $region21: #{tpu_custom_call.1} parent=1 // pred_fallthru
      _
    // Predicated region
    $region22: #{tpu_custom_call.1} parent=1 // pred_check
      _
    $region23: #{tpu_custom_call.1} parent=1 // pred_check_branch
      %60 = sbr.rel (0) target = $region25
    $region24: #{tpu_custom_call.1} parent=1 // pred_region
      %62 = vsyncadd [#allocation10], 0
      %s63 = sshll.u32 %s5, 4
      %s64 = int_to_ptr.hbm [resolvable:$true] %s63
      %s65 = sshll.u32 [#allocation9], 4
      %s66 = int_to_ptr.vmem [resolvable:$true] %s65
      %71 = dma.hbm_to_vmem [thread:$0]  %s64, 1024, %s66, [#allocation10], 64, 64, 4
    $region25: #{tpu_custom_call.1} parent=1 // pred_fallthru
      _
    // Predicated region
    $region26: #{tpu_custom_call.1} parent=1 // pred_check
      _
    $region27: #{tpu_custom_call.1} parent=1 // pred_check_branch
      %73 = sbr.rel (0) target = $region29
    $region28: #{tpu_custom_call.1} parent=1 // pred_region
      _
    $region29: #{tpu_custom_call.1} parent=1 // pred_fallthru
      _
    // Predicated region
    $region30: #{tpu_custom_call.1} parent=1 // pred_check
      _
    $region31: #{tpu_custom_call.1} parent=1 // pred_check_branch
      %75 = sbr.rel (0) target = $region33
    $region32: #{tpu_custom_call.1} parent=1 // pred_region
      _
    $region33: #{tpu_custom_call.1} parent=1 // pred_fallthru
      _
    // Predicated region
    $region34: #{tpu_custom_call.1} parent=1 // pred_check
      _
    $region35: #{tpu_custom_call.1} parent=1 // pred_check_branch
      %77 = sbr.rel (0) target = $region37
    $region36: #{tpu_custom_call.1} parent=1 // pred_region
      _
    $region37: #{tpu_custom_call.1} parent=1 // pred_fallthru
      _
    // Predicated region
    $region38: #{tpu_custom_call.1} parent=1 // pred_check
      _
    $region39: #{tpu_custom_call.1} parent=1 // pred_check_branch
      %79 = sbr.rel (0) target = $region41
    $region40: #{tpu_custom_call.1} parent=1 // pred_region
      %81 = dma.done [#allocation4], 64
    $region41: #{tpu_custom_call.1} parent=1 // pred_fallthru
      _
    // Predicated region
    $region42: #{tpu_custom_call.1} parent=1 // pred_check
      _
    $region43: #{tpu_custom_call.1} parent=1 // pred_check_branch
      %83 = sbr.rel (0) target = $region45
    $region44: #{tpu_custom_call.1} parent=1 // pred_region
      %85 = dma.done [#allocation7], 64
    $region45: #{tpu_custom_call.1} parent=1 // pred_fallthru
      _
    // Predicated region
    $region46: #{tpu_custom_call.1} parent=1 // pred_check
      _
    $region47: #{tpu_custom_call.1} parent=1 // pred_check_branch
      %87 = sbr.rel (0) target = $region49
    $region48: #{tpu_custom_call.1} parent=1 // pred_region
      %89 = dma.done [#allocation7], 128
    $region49: #{tpu_custom_call.1} parent=1 // pred_fallthru
      _
    // Predicated region
    $region50: #{tpu_custom_call.1} parent=1 // pred_check
      _
    $region51: #{tpu_custom_call.1} parent=1 // pred_check_branch
      %91 = sbr.rel (0) target = $region53
    $region52: #{tpu_custom_call.1} parent=1 // pred_region
      %93 = dma.done [#allocation10], 1024
    $region53: #{tpu_custom_call.1} parent=1 // pred_fallthru
      _
    %v95 = vld [vmem:[#allocation3] sm:$0xf]
    %v96 = vld [vmem:[#allocation8] sm:$0xf]
    %v97 = vld [vmem:[#allocation8 + $0x4] sm:$0xf]
    %v98 = vld [vmem:[#allocation6] sm:$0xf]
    %v99 = vld [vmem:[%s3] sm:$0xf]
    %vm100 = vcmask 64512
    %v102 = vsel %vm100, %v98, 0
    %vm104 = vcmask 1043456
    %v106 = vsel %vm104, %v99, 0
    %108 = vmatpush.bf16.msra.mxu0 0
    %109 = vmatpush.bf16.msra.mxu0 0
    %110 = vmatpush.bf16.msra.mxu0 0
    %111 = vmatpush.bf16.msra.mxu0 0
    %112 = vmatpush.bf16.msra.mxu0 0
    %113 = vmatpush.bf16.msra.mxu0 0
    %114 = vmatpush.bf16.msra.mxu0 0
    %115 = vmatpush.bf16.msra.mxu0 %v106
    %116 = vmatmul.bf16.gmra.mxu0 %v102
    %v117 = vpop.f32.mrf.mxu0
    %v118 = vadd.f32 0.0, %v117
    %v119 = vpop.f32.mrf.mxu0
    %120 = vdwg.mxu0
    %v123 = vunpack.c.l.b16 %v96
    %v124 = vunpack.c.l.b16 %v97
    %v125 = vpack.c.b16 %v124, %v123
    %vm127 = vcmask 130048
    %v129 = vsel %vm127, %v95, 0
    %131 = vmatpush.bf16.msra.mxu0 0
    %132 = vmatpush.bf16.msra.mxu0 0
    %133 = vmatpush.bf16.msra.mxu0 0
    %134 = vmatpush.bf16.msra.mxu0 0
    %135 = vmatpush.bf16.msra.mxu0 0
    %136 = vmatpush.bf16.msra.mxu0 0
    %137 = vmatpush.bf16.msra.mxu0 0
    %138 = vmatpush.bf16.msra.mxu0 %v125
    %139 = vmatmul.bf16.gmra.mxu0 %v129
    %v140 = vpop.f32.mrf.mxu0
    %v141 = vadd.f32 %v118, %v140
    %v142 = vpop.f32.mrf.mxu0
    %143 = vdwg.mxu0
    %v144 = vld [vmem:[%s4] sm:$0x1]
    %v145 = vunpack.c.l.bf16 %v144
    %v146 = vperm.slane %v145, 0
    %v147 = vadd.f32 %v141, %v146
    %v148 = vmax.f32 %v147, 0.0
    %v149 = vpack.c.bf16 %v148, %v148
    %v150 = vld [vmem:[#allocation9] sm:$0xf]
    %v151 = vld [vmem:[#allocation9 + $0x4] sm:$0xf]
    %v152 = vld [vmem:[#allocation9 + $0x8] sm:$0xf]
    %v153 = vld [vmem:[#allocation9 + $0xc] sm:$0xf]
    %v154 = vld [vmem:[#allocation9 + $0x10] sm:$0xf]
    %v155 = vld [vmem:[#allocation9 + $0x14] sm:$0xf]
    %v156 = vld [vmem:[#allocation9 + $0x18] sm:$0xf]
    %v157 = vld [vmem:[#allocation9 + $0x1c] sm:$0xf]
    %v158 = vld [vmem:[#allocation9 + $0x20] sm:$0xf]
    %v159 = vld [vmem:[#allocation9 + $0x24] sm:$0xf]
    %v160 = vld [vmem:[#allocation9 + $0x28] sm:$0xf]
    %v161 = vld [vmem:[#allocation9 + $0x2c] sm:$0xf]
    %v162 = vld [vmem:[#allocation9 + $0x30] sm:$0xf]
    %v163 = vld [vmem:[#allocation9 + $0x34] sm:$0xf]
    %v164 = vld [vmem:[#allocation9 + $0x38] sm:$0xf]
    %v165 = vld [vmem:[#allocation9 + $0x3c] sm:$0xf]
    %v166 = vld [vmem:[%s6] sm:$0x1]
    %v167 = vunpack.c.l.bf16 %v166
    %v168 = vperm.slane %v167, 0
    %v185 = vunpack.c.l.b16 %v150
    %v186 = vunpack.c.l.b16 %v151
    %v187 = vunpack.c.l.b16 %v152
    %v188 = vunpack.c.l.b16 %v153
    %v189 = vunpack.c.l.b16 %v154
    %v190 = vunpack.c.l.b16 %v155
    %v191 = vunpack.c.l.b16 %v156
    %v192 = vunpack.c.l.b16 %v157
    %v193 = vunpack.c.l.b16 %v158
    %v194 = vunpack.c.l.b16 %v159
    %v195 = vunpack.c.l.b16 %v160
    %v196 = vunpack.c.l.b16 %v161
    %v197 = vunpack.c.l.b16 %v162
    %v198 = vunpack.c.l.b16 %v163
    %v199 = vunpack.c.l.b16 %v164
    %v200 = vunpack.c.l.b16 %v165
    %v201 = vpack.c.b16 %v186, %v185
    %v202 = vpack.c.b16 %v188, %v187
    %v203 = vpack.c.b16 %v190, %v189
    %v204 = vpack.c.b16 %v192, %v191
    %v205 = vpack.c.b16 %v194, %v193
    %v206 = vpack.c.b16 %v196, %v195
    %v207 = vpack.c.b16 %v198, %v197
    %v208 = vpack.c.b16 %v200, %v199
    %217 = vmatpush.bf16.msra.mxu0 %v208
    %218 = vmatpush.bf16.msra.mxu0 %v207
    %219 = vmatpush.bf16.msra.mxu0 %v206
    %220 = vmatpush.bf16.msra.mxu0 %v205
    %221 = vmatpush.bf16.msra.mxu0 %v204
    %222 = vmatpush.bf16.msra.mxu0 %v203
    %223 = vmatpush.bf16.msra.mxu0 %v202
    %224 = vmatpush.bf16.msra.mxu0 %v201
    %225 = vmatmul.bf16.gmra.mxu0 %v149
    %v226 = vpop.f32.mrf.mxu0
    %v227 = vadd.f32 %v168, %v226
    %v228 = vpop.f32.mrf.mxu0
    %229 = vdwg.mxu0
    %v230 = vmax.f32 %v227, 0.0
    %v231 = vld [vmem:[%s7] sm:$0x1]
    %v232 = vunpack.c.l.bf16 %v231
    %v233 = vperm.slane %v232, 0
    %v234 = vmul.f32 %v230, %v233
    %235 = vadd.xlane.f32.xlu0 %v234
    %v236 = vpop.xlane.xlu0 %235
    %237 = vxpose.xlu0.b32.start [1/16] %v236, 128
    %238 = vxpose.xlu0.b32.cont [2/16] 0.0, 128
    %239 = vxpose.xlu0.b32.cont [3/16] 0.0, 128
    %240 = vxpose.xlu0.b32.cont [4/16] 0.0, 128
    %241 = vxpose.xlu0.b32.cont [5/16] 0.0, 128
    %242 = vxpose.xlu0.b32.cont [6/16] 0.0, 128
    %243 = vxpose.xlu0.b32.cont [7/16] 0.0, 128
    %244 = vxpose.xlu0.b32.cont [8/16] 0.0, 128
    %245 = vxpose.xlu0.b32.cont [9/16] 0.0, 128
    %246 = vxpose.xlu0.b32.cont [10/16] 0.0, 128
    %247 = vxpose.xlu0.b32.cont [11/16] 0.0, 128
    %248 = vxpose.xlu0.b32.cont [12/16] 0.0, 128
    %249 = vxpose.xlu0.b32.cont [13/16] 0.0, 128
    %250 = vxpose.xlu0.b32.cont [14/16] 0.0, 128
    %251 = vxpose.xlu0.b32.cont [15/16] 0.0, 128
    %252 = vxpose.xlu0.b32.end [16/16] 0.0, 128
    %v253 = vpop.trf.xlu0
    %v254 = vpop.trf.xlu0
    %v255 = vpop.trf.xlu0
    %v256 = vpop.trf.xlu0
    %v257 = vpop.trf.xlu0
    %v258 = vpop.trf.xlu0
    %v259 = vpop.trf.xlu0
    %v260 = vpop.trf.xlu0
    %v261 = vpop.trf.xlu0
    %v262 = vpop.trf.xlu0
    %v263 = vpop.trf.xlu0
    %v264 = vpop.trf.xlu0
    %v265 = vpop.trf.xlu0
    %v266 = vpop.trf.xlu0
    %v267 = vpop.trf.xlu0
    %v268 = vpop.trf.xlu0
    %v269 = vld [vmem:[#allocation2] sm:$0x1]
    %v270 = vunpack.c.l.bf16 %v269
    %272 = vset.pattern.permute.xlu0 0
    %273 = vperm.xlu0 %272, %v270
    %v274 = vpop.permute.xlu0 %273
    %v277 = vunpack.c.l.s4 269488144
    %v278 = vunpack.c.0.s8 %v277
    %v279 = vperm.slane %v274, %v278
    %v280 = vadd.f32 %v253, %v279
    %vm281 = vcmask 57344
    %282 = vst.msk [vmem:[#allocation11] sm:$0x1] %vm281, %v280
    // Predicated region
    $region54: #{tpu_custom_call.1} parent=1 // pred_check
      _
    $region55: #{tpu_custom_call.1} parent=1 // pred_check_branch
      %284 = sbr.rel (0) target = $region57
    $region56: #{tpu_custom_call.1} parent=1 // pred_region
      %286 = vsyncadd [#allocation5], 0
      %s288 = sshll.u32 [#allocation11], 4
      %s289 = int_to_ptr.vmem [resolvable:$true] %s288
      %s290 = sshll.u32 %s9, 4
      %s291 = int_to_ptr.hbm [resolvable:$true] %s290
      %293 = dma.vmem_to_hbm [thread:$0]  %s289, 16, %s291, [#allocation5]
    $region57: #{tpu_custom_call.1} parent=1 // pred_fallthru
      _
    // Predicated region
    $region58: #{tpu_custom_call.1} parent=1 // pred_check
      _
    $region59: #{tpu_custom_call.1} parent=1 // pred_check_branch
      %295 = sbr.rel (0) target = $region61
    $region60: #{tpu_custom_call.1} parent=1 // pred_region
      %297 = dma.done [#allocation5], 16
    $region61: #{tpu_custom_call.1} parent=1 // pred_fallthru
      _
    %298 = vsyncpa [#allocation4], 1
    %299 = vsyncpa [#allocation7], 1
    %300 = vsyncpa [#allocation10], 1
    %301 = vsyncpa [#allocation5], 1

</llo_original>
